<compile_context>
chip_gen: v6e
topology: v6e:2x2x1
jax: 0.10.0
libtpu: 0.0.40
codegen_flags: <defaults>
</compile_context>

<pallas_src>
import math

import jax
import jax.numpy as jnp
from jax.experimental import pallas as pl
from jax.experimental.pallas import tpu as pltpu

_LANE = 128
_SUBLANE = 8
_SPLITS = 3                                # bf16 pieces per f32 position (~24 bits)
_VMEM_BUDGET = 24 * 1024 * 1024            # double-buffered in+out tile budget
_VMEM_LIMIT = 32 * 1024 * 1024             # scoped VMEM limit (ok on v5e/v6e/v7x)


def _sinpos_kernel(x_ref, s_ref, theta_ref, phase_ref, out_ref):
    # x_ref:     (TR, SPLITS*R) bf16  positions split into bf16 hi/mid/lo pieces
    # s_ref:     (SPLITS*R, L)  bf16  0/1 owner-selection matrix (tiled per piece)
    # theta_ref: (1, L)         f32   tiled inverse frequencies (period d_model)
    # phase_ref: (1, L)         f32   0 for cos lanes, -pi/2 for sin lanes
    # out_ref:   (TR, L)              lane-dense output rows
    #
    # MXU (otherwise idle): replicate each position across its d_model lanes and
    # reconstruct its full f32 value -- bf16 x {0,1} products are exact and the
    # accumulation is f32, so this is ulp-accurate on v5e/v6e/v7x regardless of
    # the MXU's f32 contraction-precision mode, while using the fastest
    # (single-pass bf16) matmul path.
    x_rep = jnp.dot(x_ref[...], s_ref[...], preferred_element_type=jnp.float32)
    # VPU: one mul + one add per element; EUP: one cos per element
    # (sin lanes use the identity sin(z) = cos(z - pi/2)).
    arg = x_rep * theta_ref[...] + phase_ref[...]
    out_ref[...] = jnp.cos(arg).astype(out_ref.dtype)


def _split_bf16(x, n_pieces):
    """Split f32 -> n_pieces bf16 arrays whose f32 sum reconstructs x (~exact)."""
    pieces = []
    rem = x
    for _ in range(n_pieces):
        p = rem.astype(jnp.bfloat16)
        pieces.append(p)
        rem = rem - p.astype(jnp.float32)
    return pieces


def sinusoidal_pos_emb(x, d_model, base=100000.0, block_rows=None,
                       out_dtype=jnp.float32):
    """Pallas TPU sinusoidal positional embedding.

    Returns (N, d_model) with rows [cos(x*theta) | sin(x*theta)], N = x.size.
    out_dtype=jnp.bfloat16 halves writeback bytes on mem-bound v5e/v6e when the
    consumer accepts it (math stays f32; cast only at the store).
    """
    assert d_model % 2 == 0
    half = d_model // 2
    itemsize = jnp.dtype(out_dtype).itemsize

    # Lane-dense packing: L lanes per output row, R positions packed per row.
    L = (d_model * _LANE) // math.gcd(d_model, _LANE)
    R = L // d_model
    K = _SPLITS * R

    x_flat = jnp.reshape(x, (-1,)).astype(jnp.float32)
    n = x_flat.shape[0]
    if n == 0:
        return jnp.zeros((0, d_model), out_dtype)

    # Exact row count; only a sub-sublane (< 8 row) remainder is ever padded.
    n_rows = -(-n // R)
    rows_arr = max(n_rows, _SUBLANE)

    # Row tile: multiple of 8 sublanes, <= rows_arr, sized so the
    # double-buffered output tile + lane-padded bf16 input tile fit the budget.
    row_bytes = L * itemsize + _LANE * 2       # out row + (tr,K)->(tr,128) bf16 row
    tr_cap = max(_SUBLANE,
                 (_VMEM_BUDGET // (2 * row_bytes)) // _SUBLANE * _SUBLANE)
    tr = min(tr_cap, (rows_arr // _SUBLANE) * _SUBLANE)
    if block_rows is not None:
        tr = min(tr, max(_SUBLANE, (block_rows // _SUBLANE) * _SUBLANE))
    tr = max(_SUBLANE, tr)

    # Pack R positions per row; split each into bf16 pieces (exact reconstruct).
    # Input-side pads are tiny (input is d_model x smaller than the output).
    n_pack = rows_arr * R
    if n_pack != n:
        x_flat = jnp.pad(x_flat, (0, n_pack - n))
    x2 = x_flat.reshape(rows_arr, R)
    x_split = jnp.concatenate(_split_bf16(x2, _SPLITS), axis=1)        # (rows, K)

    # Resident operands (the torch module's non-persistent `theta` buffer),
    # tiled to the lane-dense row pattern.
    theta = 1.0 / (base ** (2.0 * jnp.arange(half, dtype=jnp.float32) / d_model))
    theta_l = jnp.tile(jnp.concatenate([theta, theta]), R).reshape(1, L)
    phase_l = jnp.tile(jnp.concatenate(
        [jnp.zeros((half,), jnp.float32),
         jnp.full((half,), -0.5 * jnp.pi, jnp.float32)]), R).reshape(1, L)
    owner = jnp.arange(L, dtype=jnp.int32) // d_model                  # (L,)
    sel = owner[None, :] == jnp.arange(R, dtype=jnp.int32)[:, None]    # (R, L)
    s_mat = jnp.tile(sel.astype(jnp.bfloat16), (_SPLITS, 1))           # (K, L)

    grid = (pl.cdiv(rows_arr, tr),)      # ragged last block is masked by Pallas

    out2 = pl.pallas_call(
        _sinpos_kernel,
        out_shape=jax.ShapeDtypeStruct((rows_arr, L), out_dtype),
        grid=grid,
        in_specs=[
            pl.BlockSpec((tr, K), lambda i: (i, 0)),    # packed split positions
            pl.BlockSpec((K, L), lambda i: (0, 0)),     # owner selection (resident)
            pl.BlockSpec((1, L), lambda i: (0, 0)),     # theta pattern (resident)
            pl.BlockSpec((1, L), lambda i: (0, 0)),     # phase pattern (resident)
        ],
        out_specs=pl.BlockSpec((tr, L), lambda i: (i, 0)),
        compiler_params=pltpu.CompilerParams(
            # TODO(synk): on v7x, confirm via xprof that this single "parallel"
            # axis really splits across both TensorCores; if not, switch to
            # core-parallel semantics / pl.core_map over a leading axis of 2.
            dimension_semantics=("parallel",),
            vmem_limit_bytes=_VMEM_LIMIT,
        ),
        cost_estimate=pl.CostEstimate(
            flops=2 * rows_arr * K * L + 2 * rows_arr * L,
            transcendentals=rows_arr * L,
            bytes_accessed=(rows_arr * K * 2 + K * L * 2 + 2 * L * 4
                            + rows_arr * L * itemsize),
        ),
    )(x_split, s_mat, theta_l, phase_l)

    # Free reshape (identical row-major bytes); trim only the small remainder
    # (< 8 rows / < R positions) -- never a multiple-of-tile slab.
    out = out2.reshape(n_pack, d_model)
    if n_pack != n:
        out = out[:n]
    return out
    # TODO(synk): for the actual diffusion-timestep use case (N ~ batch size)
    # the fixed pallas_call overhead dominates; a fused jnp expression is fine.


def _reference(x, d_model, base=100000.0):
    half = d_model // 2
    theta = 1.0 / (base ** (2.0 * jnp.arange(half, dtype=jnp.float32) / d_model))
    xf = jnp.reshape(x, (-1, 1)).astype(jnp.float32) * theta          # (N, half)
    stacked = jnp.stack((jnp.cos(xf), jnp.sin(xf)), axis=1)           # (N, 2, half)
    return stacked.reshape(stacked.shape[0], -1)                      # (N, d_model)


if __name__ == "__main__":
    key = jax.random.PRNGKey(0)
    k0, k1, k2 = jax.random.split(key, 3)

    # Error budget vs the f32 reference: sin lanes use cos(z - pi/2) (~4e-6 at
    # |z|~100), plus the bf16 triple-split reconstruction / f32 accumulation
    # (a few ulp of |z|~100, i.e. ~1e-5).  5e-5 is still f32-grade, orders of
    # magnitude below any bf16-truncated path (~4e-3).
    ATOL, RTOL = 5e-5, 1e-5

    # Case 1: module-sized input (e.g. diffusion timesteps), d_model=32, N=16.
    d1 = 32
    x1 = jax.random.uniform(k0, (2, 8), dtype=jnp.float32) * 100.0
    out1 = jax.block_until_ready(sinusoidal_pos_emb(x1, d1))
    ref1 = _reference(x1, d1)
    assert out1.shape == (16, d1), out1.shape
    assert jnp.allclose(out1, ref1, atol=ATOL, rtol=RTOL), "mismatch (case 1)"

    # Case 2: multi-step grid with a ragged last block (600 rows, 64-row tiles).
    d2 = 64
    x2 = jax.random.uniform(k1, (4, 300), dtype=jnp.float32) * 100.0   # N = 1200
    out2 = jax.block_until_ready(sinusoidal_pos_emb(x2, d2, block_rows=64))
    ref2 = _reference(x2, d2)
    assert out2.shape == (1200, d2), out2.shape
    assert jnp.allclose(out2, ref2, atol=ATOL, rtol=RTOL), "mismatch (case 2)"

    # Case 3: N not divisible by R (trailing-remainder path), d_model=32.
    d3 = 32
    x3 = jax.random.uniform(k2, (101,), dtype=jnp.float32) * 100.0
    out3 = jax.block_until_ready(sinusoidal_pos_emb(x3, d3))
    ref3 = _reference(x3, d3)
    assert out3.shape == (101, d3), out3.shape
    assert jnp.allclose(out3, ref3, atol=ATOL, rtol=RTOL), "mismatch (case 3)"

    # Case 4: bf16 store path (math in f32, cast at store) for mem-bound chips.
    out4 = jax.block_until_ready(
        sinusoidal_pos_emb(x2, d2, block_rows=64, out_dtype=jnp.bfloat16))
    assert out4.dtype == jnp.bfloat16
    assert jnp.allclose(out4.astype(jnp.float32), ref2, atol=1e-2, rtol=1e-2), \
        "mismatch (case 4, bf16 store)"

    print("KERNEL_OK")
</pallas_src>

<mosaic_0001>
module attributes {stable_mosaic.version = 11 : i64} {
  func.func @_sinpos_kernel(%arg0: i32, %arg1: memref<8x12xbf16, #tpu.memory_space<vmem>>, %arg2: memref<12x128xbf16, #tpu.memory_space<vmem>>, %arg3: memref<1x128xf32, #tpu.memory_space<vmem>>, %arg4: memref<1x128xf32, #tpu.memory_space<vmem>>, %arg5: memref<8x128xf32, #tpu.memory_space<vmem>>) attributes {dimension_semantics = [#tpu.dimension_semantics<parallel>], iteration_bounds = array<i64: 1>, scalar_prefetch = 0 : i64, scratch_operands = 0 : i64, tpu.core_type = #tpu.core_type<tc>, window_params = [{transform_indices = @transform_0, window_bounds = array<i64: 8, 12>}, {pipeline_mode = #tpu.pipeline_mode<synchronous>, transform_indices = @transform_1, window_bounds = array<i64: 12, 128>}, {pipeline_mode = #tpu.pipeline_mode<synchronous>, transform_indices = @transform_2, window_bounds = array<i64: 1, 128>}, {pipeline_mode = #tpu.pipeline_mode<synchronous>, transform_indices = @transform_3, window_bounds = array<i64: 1, 128>}, {transform_indices = @transform_4, window_bounds = array<i64: 8, 128>}]} {
    %c0 = arith.constant 0 : index
    %c0_0 = arith.constant 0 : index
    %0 = vector.load %arg1[%c0, %c0_0] : memref<8x12xbf16, #tpu.memory_space<vmem>>, vector<8x12xbf16>
    %c0_1 = arith.constant 0 : index
    %c0_2 = arith.constant 0 : index
    %1 = vector.load %arg2[%c0_1, %c0_2] : memref<12x128xbf16, #tpu.memory_space<vmem>>, vector<12x128xbf16>
    %cst = arith.constant dense<0.000000e+00> : vector<8x128xf32>
    %2 = tpu.matmul %0, %1, %cst {dimension_numbers = #tpu.dot_dimension_numbers<[1], [0], [0], [1], [0, 0, 1, 1], [], []>} : vector<8x12xbf16>, vector<12x128xbf16>, vector<8x128xf32> -> vector<8x128xf32>
    %c0_3 = arith.constant 0 : index
    %c0_4 = arith.constant 0 : index
    %3 = vector.load %arg3[%c0_3, %c0_4] : memref<1x128xf32, #tpu.memory_space<vmem>>, vector<1x128xf32>
    %4 = vector.broadcast %3 : vector<1x128xf32> to vector<8x128xf32>
    %5 = arith.mulf %2, %4 : vector<8x128xf32>
    %c0_5 = arith.constant 0 : index
    %c0_6 = arith.constant 0 : index
    %6 = vector.load %arg4[%c0_5, %c0_6] : memref<1x128xf32, #tpu.memory_space<vmem>>, vector<1x128xf32>
    %7 = vector.broadcast %6 : vector<1x128xf32> to vector<8x128xf32>
    %8 = arith.addf %5, %7 : vector<8x128xf32>
    %9 = math.cos %8 : vector<8x128xf32>
    %c0_7 = arith.constant 0 : index
    %c0_8 = arith.constant 0 : index
    %10 = vector.load %arg5[%c0_7, %c0_8] : memref<8x128xf32, #tpu.memory_space<vmem>>, vector<8x128xf32>
    tpu.vector_store %arg5[%c0_7, %c0_8], %9 {strides = array<i32>} : memref<8x128xf32, #tpu.memory_space<vmem>>, vector<8x128xf32>,
    return
  }
  func.func @transform_0(%arg0: i32) -> (i32, i32) {
    %c0_i32 = arith.constant 0 : i32
    %c0_i32_0 = arith.constant 0 : i32
    return %arg0, %c0_i32 : i32, i32
  }
  func.func @transform_1(%arg0: i32) -> (i32, i32) {
    %c0_i32 = arith.constant 0 : i32
    %c0_i32_0 = arith.constant 0 : i32
    %c0_i32_1 = arith.constant 0 : i32
    return %c0_i32, %c0_i32_0 : i32, i32
  }
  func.func @transform_2(%arg0: i32) -> (i32, i32) {
    %c0_i32 = arith.constant 0 : i32
    %c0_i32_0 = arith.constant 0 : i32
    %c0_i32_1 = arith.constant 0 : i32
    return %c0_i32, %c0_i32_0 : i32, i32
  }
  func.func @transform_3(%arg0: i32) -> (i32, i32) {
    %c0_i32 = arith.constant 0 : i32
    %c0_i32_0 = arith.constant 0 : i32
    %c0_i32_1 = arith.constant 0 : i32
    return %c0_i32, %c0_i32_0 : i32, i32
  }
  func.func @transform_4(%arg0: i32) -> (i32, i32) {
    %c0_i32 = arith.constant 0 : i32
    %c0_i32_0 = arith.constant 0 : i32
    return %arg0, %c0_i32 : i32, i32
  }
}

</mosaic_0001>

<llo_original>
// kernel: tpu_custom_call.1
$region0: #{tpu_custom_call.1}
  #allocation0 [shape = 'u32[]', space=smem, size = 0x4, offset = 0x4, fixed_abs, tag = 'smem constant byte address 0x4 - core index']
  #allocation1 [shape = 'u32[144,128]{1,0:T(1,128)}', space=vmem, size = 0x12000, scoped, tag = 'internal scratch']
  %s0 = inlined_call_operand.hbm [shape: bf16[8,12], index: 0, kind: input, shape index: {}]
  %s1 = inlined_call_operand.hbm [shape: bf16[12,128], index: 1, kind: input, shape index: {}]
  %s2 = inlined_call_operand.vmem [shape: f32[1,128], index: 2, kind: input, shape index: {}]
  %s3 = inlined_call_operand.vmem [shape: f32[1,128], index: 3, kind: input, shape index: {}]
  %s4 = inlined_call_operand.hbm [shape: f32[8,128], index: 4, kind: output, shape index: {}]
  %s5 = sld [smem:[#allocation0]]
  $region34: #{tpu_custom_call.1} parent=0
    _
  %s7 = ssub.s32 1, %s5
  %s8 = scalar_select 0, %s7, %s5
  $region1: #{tpu_custom_call.1} parent=0
    #allocation2 [shape = 'u8[2048]{0}', space=vmem, size = 0x800, scoped, tag = 'input window, operand 0, single buffered']
    #allocation3 [shape = 's32[1]{0}', space=sflag, size = 0x4, scoped, tag = 'scoped memory for tpu_custom_call.1']
    #allocation4 [shape = 's32[1]{0}', space=sflag, size = 0x4, scoped, tag = 'scoped memory for tpu_custom_call.1']
    #allocation5 [shape = 'u8[4096]{0}', space=vmem, size = 0x1000, scoped, tag = 'input window, operand 1, single buffered']
    #allocation6 [shape = 's32[1]{0}', space=sflag, size = 0x4, scoped, tag = 'scoped memory for tpu_custom_call.1']
    #allocation7 [shape = 'u8[4096]{0}', space=vmem, size = 0x1000, scoped, tag = 'output window, operand 0, single buffered']
    %9 = vsyncpa [#allocation3], 0
    %10 = vsyncpa [#allocation6], 0
    %11 = vsyncpa [#allocation4], 0
    // Predicated region
    $region2: #{tpu_custom_call.1} parent=1 // pred_check
      _
    $region3: #{tpu_custom_call.1} parent=1 // pred_check_branch
      %13 = sbr.rel (0) target = $region5
    $region4: #{tpu_custom_call.1} parent=1 // pred_region
      %s15 = ssub.s32 64, 64
      %16 = vsyncadd [#allocation3], %s15
      %s18 = sshll.u32 [#allocation2], 4
      %s19 = int_to_ptr.vmem [resolvable:$true] %s18
      %21 = dma.hbm_to_vmem [thread:$0]  %s0, 64, %s19, [#allocation3]
    $region5: #{tpu_custom_call.1} parent=1 // pred_fallthru
      _
    // Predicated region
    $region6: #{tpu_custom_call.1} parent=1 // pred_check
      _
    $region7: #{tpu_custom_call.1} parent=1 // pred_check_branch
      %23 = sbr.rel (0) target = $region9
    $region8: #{tpu_custom_call.1} parent=1 // pred_region
      %s25 = ssub.s32 128, 128
      %26 = vsyncadd [#allocation6], %s25
      %s27 = sshll.u32 [#allocation5], 4
      %s28 = int_to_ptr.vmem [resolvable:$true] %s27
      %33 = dma.hbm_to_vmem [thread:$0]  %s1, 128, %s28, [#allocation6], 64, 64, 4
    $region9: #{tpu_custom_call.1} parent=1 // pred_fallthru
      _
    // Predicated region
    $region10: #{tpu_custom_call.1} parent=1 // pred_check
      _
    $region11: #{tpu_custom_call.1} parent=1 // pred_check_branch
      %35 = sbr.rel (0) target = $region13
    $region12: #{tpu_custom_call.1} parent=1 // pred_region
      _
    $region13: #{tpu_custom_call.1} parent=1 // pred_fallthru
      _
    // Predicated region
    $region14: #{tpu_custom_call.1} parent=1 // pred_check
      _
    $region15: #{tpu_custom_call.1} parent=1 // pred_check_branch
      %37 = sbr.rel (0) target = $region17
    $region16: #{tpu_custom_call.1} parent=1 // pred_region
      _
    $region17: #{tpu_custom_call.1} parent=1 // pred_fallthru
      _
    // Predicated region
    $region18: #{tpu_custom_call.1} parent=1 // pred_check
      _
    $region19: #{tpu_custom_call.1} parent=1 // pred_check_branch
      %39 = sbr.rel (0) target = $region21
    $region20: #{tpu_custom_call.1} parent=1 // pred_region
      %40 = dma.done [#allocation3], 64
    $region21: #{tpu_custom_call.1} parent=1 // pred_fallthru
      _
    // Predicated region
    $region22: #{tpu_custom_call.1} parent=1 // pred_check
      _
    $region23: #{tpu_custom_call.1} parent=1 // pred_check_branch
      %42 = sbr.rel (0) target = $region25
    $region24: #{tpu_custom_call.1} parent=1 // pred_region
      %43 = dma.done [#allocation6], 128
    $region25: #{tpu_custom_call.1} parent=1 // pred_fallthru
      _
    %v45 = vld [vmem:[#allocation2] sm:$0xf]
    %v46 = vld [vmem:[#allocation5] sm:$0xf]
    %v47 = vld [vmem:[#allocation5 + $0x4] sm:$0x3]
    %v50 = vunpack.c.l.b16 %v46
    %v51 = vunpack.c.l.b16 %v47
    %v52 = vpack.c.b16 %v51, %v50
    %vm53 = vcmask 97280
    %v55 = vsel %vm53, %v45, 0
    %vm57 = vcmask 1045504
    %v59 = vsel %vm57, %v52, 0
    %61 = vmatprep.subr.bf16.mxu0 0
    %62 = vmatpush1.bf16.msra.mxu0 0
    %63 = vmatprep.subr.bf16.mxu0 0
    %64 = vmatpush1.bf16.msra.mxu0 0
    %65 = vmatprep.subr.bf16.mxu0 0
    %66 = vmatpush1.bf16.msra.mxu0 0
    %67 = vmatprep.subr.bf16.mxu0 0
    %68 = vmatpush1.bf16.msra.mxu0 0
    %69 = vmatprep.subr.bf16.mxu0 0
    %70 = vmatpush1.bf16.msra.mxu0 0
    %71 = vmatprep.subr.bf16.mxu0 0
    %72 = vmatpush1.bf16.msra.mxu0 0
    %73 = vmatprep.subr.bf16.mxu0 0
    %74 = vmatpush1.bf16.msra.mxu0 0
    %75 = vmatprep.subr.bf16.mxu0 0
    %76 = vmatpush1.bf16.msra.mxu0 %v59
    %77 = vmatprep.subr.bf16.mxu0 0
    %78 = vmatpush2.bf16.msra.mxu0 0
    %79 = vmatprep.subr.bf16.mxu0 0
    %80 = vmatpush2.bf16.msra.mxu0 0
    %81 = vmatprep.subr.bf16.mxu0 0
    %82 = vmatpush2.bf16.msra.mxu0 0
    %83 = vmatprep.subr.bf16.mxu0 0
    %84 = vmatpush2.bf16.msra.mxu0 0
    %85 = vmatprep.subr.bf16.mxu0 0
    %86 = vmatpush2.bf16.msra.mxu0 0
    %87 = vmatprep.subr.bf16.mxu0 0
    %88 = vmatpush2.bf16.msra.mxu0 0
    %89 = vmatprep.subr.bf16.mxu0 0
    %90 = vmatpush2.bf16.msra.mxu0 0
    %91 = vmatprep.subr.bf16.mxu0 0
    %92 = vmatpush2.bf16.msra.mxu0 0
    %93 = vmatprep.mubr.bf16.mxu0 0
    %94 = vmatmul.mubr.bf16.gmra.mxu0 %v55
    %v95 = vpop.f32.mrf.mxu0
    %v96 = vadd.f32 0.0, %v95
    %v97 = vpop.f32.mrf.mxu0
    %v98 = vpop.f32.mrf.mxu0
    %v99 = vpop.f32.mrf.mxu0
    %100 = vdwg.mxu0
    %v101 = vld [vmem:[%s2] sm:$0x1]
    %v103 = vlaneseq
    %v104 = vshrl.u32 %v103, 7
    %v105 = vsub.s32 0, %v104
    %v106 = vrot.slane %v101, %v105
    %v108 = vmul.f32 %v96, %v106
    %v109 = vld [vmem:[%s3] sm:$0x1]
    %v111 = vlaneseq
    %v112 = vshrl.u32 %v111, 7
    %v113 = vsub.s32 0, %v112
    %v114 = vrot.slane %v109, %v113
    %v116 = vadd.f32 %v108, %v114
    %v117 = vand.u32 2147483647, %v116
    %vm118 = vcmp.le.f32.partialorder %v117, 0.7853982
    %vm119 = vcmp.lt.s32.totalorder %v116, 0
    %v120 = vand.u32 %v116, 2139095040
    %v121 = vshrl.u32 %v120, 23
    %v122 = vsub.s32 %v121, 127
    %v123 = vand.u32 2147483647, %v116
    %v124 = vand.u32 %v123, 8388607
    %v125 = vor.u32 %v124, 8388608
    %v126 = vsub.s32 0, %v125
    %v127 = vadd.s32 %v122, 1
    %vm128 = vcmp.gt.s32.totalorder %v127, 0
    %v129 = vsel %vm128, %v127, 0
    %v130 = vshrl.u32 %v129, 5
    %v131 = vand.u32 %v129, 31
    %v132 = vsub.s32 32, %v131
    %v133 = vshrl.u32 683565275, %v132
    %v134 = vshll.u32 683565275, %v131
    %v135 = vshrl.u32 2475754826, %v132
    %v136 = vor.u32 %v134, %v135
    %v137 = vshll.u32 2475754826, %v131
    %v138 = vshrl.u32 2131351028, %v132
    %v139 = vor.u32 %v137, %v138
    %v140 = vshll.u32 2131351028, %v131
    %v141 = vshrl.u32 2102212464, %v132
    %v142 = vor.u32 %v140, %v141
    %v143 = vshll.u32 2102212464, %v131
    %v144 = vshrl.u32 920167782, %v132
    %v145 = vor.u32 %v143, %v144
    %v146 = vshll.u32 920167782, %v131
    %v147 = vshrl.u32 1326507024, %v132
    %v148 = vor.u32 %v146, %v147
    %vm149 = vcmp.lt.s32.totalorder %v130, 1
    %vm150 = vcmp.lt.s32.totalorder %v130, 2
    %vm151 = vcmp.lt.s32.totalorder %v130, 3
    %vm152 = vcmp.lt.s32.totalorder %v130, 4
    %v153 = vsel %vm149, %v133, %v136
    %v154 = vsel %vm152, %v142, 2102212464
    %v155 = vsel %vm151, %v139, %v154
    %v156 = vsel %vm150, %v153, %v155
    %v157 = vsel %vm149, %v136, %v139
    %v158 = vsel %vm152, %v145, 920167782
    %v159 = vsel %vm151, %v142, %v158
    %v160 = vsel %vm150, %v157, %v159
    %v161 = vsel %vm149, %v139, %v142
    %v162 = vsel %vm152, %v148, 1326507024
    %v163 = vsel %vm151, %v145, %v162
    %v164 = vsel %vm150, %v161, %v163
    %v165 = vshll.u32 %v125, 8
    %v166 = vmul.u32.u64.compose %v165, %v164
    %v167 = vextract.low.u32 %v166
    %v168 = vextract.high.u32 %v166
    %v169 = vmul.u32.u64.compose %v165, %v160
    %v170 = vextract.low.u32 %v169
    %v171 = vextract.high.u32 %v169
    %v172 = vmul.u32 %v165, %v156
    %v173 = vadd.s32 %v168, %v170
    %vm174 = vc.u32 %v168, %v170
    %v175 = vadd.s32 %v171, 1
    %v176 = vsel %vm174, %v175, %v171
    %v177 = vadd.s32 %v172, %v176
    %v178 = vadd.s32 %v177, 536870912
    %v179 = vshrl.u32 %v178, 30
    %v180 = vshll.u32 %v179, 30
    %v181 = vsub.s32 %v177, %v180
    %vm182 = vcmp.lt.s32.totalorder %v181, 0
    %v183 = vsub.s32 0, %v181
    %v184 = vsel %vm182, %v183, %v181
    %v185 = vclz %v184
    %v186 = vsub.s32 %v185, 2
    %vm187 = vcmp.gt.s32.totalorder 0, %v186
    %v188 = vsel %vm187, 0, %v186
    %v189 = vsub.s32 32, %v188
    %v190 = vshll.u32 %v181, %v188
    %v191 = vshrl.u32 %v173, %v189
    %v192 = vor.u32 %v190, %v191
    %v193 = vsub.s32 4294967266, %v188
    %v194 = vadd.s32 %v193, 127
    %v195 = vshll.u32 %v194, 23
    %v196 = vor.u32 4788187, %v195
    %v197 = vand.u32 2147483647, %v196
    %v199 = vcvt.s32.f32 %v192
    %v200 = vmul.f32 %v199, %v197
    %v201 = vxor.u32 %v200, 2147483648
    %v202 = vsel %vm119, %v201, %v200
    %v203 = vsub.s32 4, %v179
    %v204 = vsel %vm119, %v203, %v179
    %v205 = vsel %vm118, %v116, %v202
    %v206 = vsel %vm118, 0, %v204
    %v207 = vcosq.f32.pop %v205
    %v208 = vsinq.f32.pop %v205
    %vm209 = vweird.f32 %v116
    %v210 = vand.u32 %v206, 3
    %vm211 = vcmp.lt.s32.totalorder %v210, 2
    %vm212 = vcmp.eq.s32.totalorder %v210, 0
    %v213 = vxor.u32 %v208, 2147483648
    %v214 = vsel %vm212, %v207, %v213
    %vm215 = vcmp.eq.s32.totalorder %v210, 2
    %v216 = vxor.u32 %v207, 2147483648
    %v217 = vsel %vm215, %v216, %v208
    %v218 = vsel %vm211, %v214, %v217
    %v219 = vsel %vm209, nan, %v218
    %220 = vst [vmem:[#allocation7] sm:$0xff] %v219
    // Predicated region
    $region26: #{tpu_custom_call.1} parent=1 // pred_check
      _
    $region27: #{tpu_custom_call.1} parent=1 // pred_check_branch
      %222 = sbr.rel (0) target = $region29
    $region28: #{tpu_custom_call.1} parent=1 // pred_region
      %s224 = ssub.s32 128, 128
      %225 = vsyncadd [#allocation4], %s224
      %s227 = sshll.u32 [#allocation7], 4
      %s228 = int_to_ptr.vmem [resolvable:$true] %s227
      %230 = dma.vmem_to_hbm [thread:$0]  %s228, 128, %s4, [#allocation4]
    $region29: #{tpu_custom_call.1} parent=1 // pred_fallthru
      _
    // Predicated region
    $region30: #{tpu_custom_call.1} parent=1 // pred_check
      _
    $region31: #{tpu_custom_call.1} parent=1 // pred_check_branch
      %232 = sbr.rel (0) target = $region33
    $region32: #{tpu_custom_call.1} parent=1 // pred_region
      %233 = dma.done [#allocation4], 128
    $region33: #{tpu_custom_call.1} parent=1 // pred_fallthru
      _
    %234 = vsyncpa [#allocation3], 1
    %235 = vsyncpa [#allocation6], 1
    %236 = vsyncpa [#allocation4], 1

</llo_original>
